<compile_context>
chip_gen: v5e
topology: v5e:2x2
jax: 0.10.0
libtpu: 0.0.40
codegen_flags: <defaults>
</compile_context>

<pallas_src>
import jax
import jax.numpy as jnp
from jax.experimental import pallas as pl
from jax.experimental.pallas import tpu as pltpu


def _model_kernel(x_ref, o_ref):
    # x_ref : (1, N) lane-dense slab in VMEM
    # o_ref : (3, N) lane-dense slab in VMEM (three stacked copies)
    x = x_ref[...].astype(jnp.float32)
    s = jnp.sum(x)                                # branch condition (scalar)
    y = jnp.where(s != 0.0, jnp.tanh(x), jnp.maximum(x, 0.0))
    # Single broadcast store: one unmasked vst instead of three masked ones.
    o_ref[...] = jnp.broadcast_to(y, o_ref.shape).astype(o_ref.dtype)


def model_forward(x):
    d0, d1, d2 = x.shape
    n = d0 * d1 * d2
    x_flat = x.reshape(1, n)                      # lane-dense 2D layout

    stacked = pl.pallas_call(
        _model_kernel,
        out_shape=jax.ShapeDtypeStruct((3, n), x.dtype),
        in_specs=[pl.BlockSpec(memory_space=pltpu.MemorySpace.VMEM)],
        out_specs=pl.BlockSpec(memory_space=pltpu.MemorySpace.VMEM),
    )(x_flat)

    # Contiguous (free) reshape: (3, N) flat == [x_flat, x_flat, x_flat]
    #                            == cat((x,x,x), dim=0).unsqueeze(0) layout.
    return stacked.reshape(1, 3 * d0, d1, d2)


if __name__ == "__main__":
    key = jax.random.PRNGKey(0)
    x = jax.random.normal(key, (2, 2, 2), dtype=jnp.float32)

    out = model_forward(x)
    jax.block_until_ready(out)

    # Reference in plain JAX (mirrors the torch semantics).
    cat = jnp.concatenate((x, x, x), axis=0)[None]
    ref = jnp.where(jnp.sum(x) != 0.0, jnp.tanh(cat), jnp.maximum(cat, 0.0))
    assert out.shape == (1, 6, 2, 2)
    assert jnp.allclose(out, ref, atol=1e-6)

    print("KERNEL_OK")
</pallas_src>

<mosaic_0001>
module attributes {stable_mosaic.version = 11 : i64} {
  func.func @_model_kernel(%arg0: memref<1x8xf32, #tpu.memory_space<vmem>>, %arg1: memref<3x8xf32, #tpu.memory_space<vmem>>) attributes {dimension_semantics = [], scalar_prefetch = 0 : i64, scratch_operands = 0 : i64, tpu.core_type = #tpu.core_type<tc>} {
    %c0 = arith.constant 0 : index
    %c0_0 = arith.constant 0 : index
    %0 = vector.load %arg0[%c0, %c0_0] : memref<1x8xf32, #tpu.memory_space<vmem>>, vector<1x8xf32>
    %1 = vector.shape_cast %0 : vector<1x8xf32> to vector<1x1x8xf32>
    %cst = arith.constant dense<0.000000e+00> : vector<1xf32>
    %2 = vector.multi_reduction <add>, %1, %cst [1, 2] : vector<1x1x8xf32> to vector<1xf32>
    %3 = vector.shape_cast %2 : vector<1xf32> to vector<1x1x1xf32>
    %4 = vector.extract %3[0, 0, 0] : f32 from vector<1x1x1xf32>
    %cst_1 = arith.constant 0.000000e+00 : f32
    %5 = arith.cmpf one, %4, %cst_1 : f32
    %6 = math.tanh %0 : vector<1x8xf32>
    %cst_2 = arith.constant 0.000000e+00 : f32
    %7 = vector.broadcast %cst_2 : f32 to vector<1x8xf32>
    %8 = arith.maximumf %0, %7 : vector<1x8xf32>
    %9 = arith.select %5, %6, %8 : vector<1x8xf32>
    %10 = vector.shape_cast %9 : vector<1x8xf32> to vector<1x8xf32>
    %11 = vector.broadcast %10 : vector<1x8xf32> to vector<3x8xf32>
    %c0_3 = arith.constant 0 : index
    %c0_4 = arith.constant 0 : index
    %12 = vector.load %arg1[%c0_3, %c0_4] : memref<3x8xf32, #tpu.memory_space<vmem>>, vector<3x8xf32>
    tpu.vector_store %arg1[%c0_3, %c0_4], %11 {strides = array<i32>} : memref<3x8xf32, #tpu.memory_space<vmem>>, vector<3x8xf32>,
    return
  }
}

</mosaic_0001>

<llo_original>
// kernel: tpu_custom_call.1
$region0: #{tpu_custom_call.1}
  #allocation0 [shape = 'u32[]', space=smem, size = 0x4, offset = 0x4, fixed_abs, tag = 'smem constant byte address 0x4 - core index']
  #allocation1 [shape = 'u32[72,128]{1,0:T(1,128)}', space=vmem, size = 0x9000, scoped, tag = 'internal scratch']
  %s0 = inlined_call_operand.hbm [shape: f32[1,8], index: 0, kind: input, shape index: {}]
  %s1 = inlined_call_operand.hbm [shape: f32[3,8], index: 1, kind: output, shape index: {}]
  %s2 = sld [smem:[#allocation0]]
  $region18: #{tpu_custom_call.1} parent=0
    _
  %s4 = ssub.s32 1, %s2
  %s5 = scalar_select 0, %s4, %s2
  $region1: #{tpu_custom_call.1} parent=0
    #allocation2 [shape = 'u8[512]{0}', space=vmem, size = 0x400, scoped, tag = 'input window, operand 0, single buffered']
    #allocation3 [shape = 's32[1]{0}', space=sflag, size = 0x4, scoped, tag = 'scoped memory for tpu_custom_call.1']
    #allocation4 [shape = 's32[1]{0}', space=sflag, size = 0x4, scoped, tag = 'scoped memory for tpu_custom_call.1']
    #allocation5 [shape = 'u8[2048]{0}', space=vmem, size = 0x800, scoped, tag = 'output window, operand 0, single buffered']
    %6 = vsyncpa [#allocation3], 0
    %7 = vsyncpa [#allocation4], 0
    // Predicated region
    $region2: #{tpu_custom_call.1} parent=1 // pred_check
      _
    $region3: #{tpu_custom_call.1} parent=1 // pred_check_branch
      %9 = sbr.rel (0) target = $region5
    $region4: #{tpu_custom_call.1} parent=1 // pred_region
      %11 = vsyncadd [#allocation3], 0
      %s13 = sshll.u32 %s0, 4
      %s14 = int_to_ptr.hbm [resolvable:$true] %s13
      %s15 = sshll.u32 [#allocation2], 4
      %s16 = int_to_ptr.vmem [resolvable:$true] %s15
      %18 = dma.hbm_to_vmem [thread:$0]  %s14, 16, %s16, [#allocation3]
    $region5: #{tpu_custom_call.1} parent=1 // pred_fallthru
      _
    // Predicated region
    $region6: #{tpu_custom_call.1} parent=1 // pred_check
      _
    $region7: #{tpu_custom_call.1} parent=1 // pred_check_branch
      %20 = sbr.rel (0) target = $region9
    $region8: #{tpu_custom_call.1} parent=1 // pred_region
      %22 = dma.done [#allocation3], 16
    $region9: #{tpu_custom_call.1} parent=1 // pred_fallthru
      _
    %v23 = vld [vmem:[#allocation2] sm:$0x1]
    %vm24 = vcmask 57344
    %v25 = vsel %vm24, %v23, 0.0
    %26 = vadd.xlane.f32.xlu0 %v25
    %v27 = vpop.xlane.xlu0 %26
    %v28 = vrot.slane %v27, 4
    %v29 = vadd.f32 %v27, %v28
    %v30 = vrot.slane %v29, 2
    %v31 = vadd.f32 %v29, %v30
    %v32 = vrot.slane %v31, 1
    %v33 = vadd.f32 %v31, %v32
    %s34 = vtos %v33
    %p35 = scmp.ne.f32.partialorder %s34, 0.0
    %v36 = vtanh.pop %v23
    %v37 = vmax.f32 %v23, 0.0
    %s38 = scalar_select %p35, 1, 0
    %v39 = vstv %s38
    %vm40 = vcmp.eq.s32.totalorder %v39, 1
    %v41 = vsel %vm40, %v36, %v37
    %v43 = vperm.slane %v41, 0
    %vm45 = vcmask 59392
    %46 = vst.msk [vmem:[#allocation5] sm:$0x7] %vm45, %v43
    // Predicated region
    $region10: #{tpu_custom_call.1} parent=1 // pred_check
      _
    $region11: #{tpu_custom_call.1} parent=1 // pred_check_branch
      %48 = sbr.rel (0) target = $region13
    $region12: #{tpu_custom_call.1} parent=1 // pred_region
      %50 = vsyncadd [#allocation4], 0
      %s52 = sshll.u32 [#allocation5], 4
      %s53 = int_to_ptr.vmem [resolvable:$true] %s52
      %s54 = sshll.u32 %s1, 4
      %s55 = int_to_ptr.hbm [resolvable:$true] %s54
      %57 = dma.vmem_to_hbm [thread:$0]  %s53, 64, %s55, [#allocation4]
    $region13: #{tpu_custom_call.1} parent=1 // pred_fallthru
      _
    // Predicated region
    $region14: #{tpu_custom_call.1} parent=1 // pred_check
      _
    $region15: #{tpu_custom_call.1} parent=1 // pred_check_branch
      %59 = sbr.rel (0) target = $region17
    $region16: #{tpu_custom_call.1} parent=1 // pred_region
      %61 = dma.done [#allocation4], 64
    $region17: #{tpu_custom_call.1} parent=1 // pred_fallthru
      _
    %62 = vsyncpa [#allocation3], 1
    %63 = vsyncpa [#allocation4], 1

</llo_original>
